<compile_context>
chip_gen: v5e
topology: v5e:2x2
jax: 0.10.0
libtpu: 0.0.40
codegen_flags: <defaults>
</compile_context>

<pallas_src>
import jax
import jax.numpy as jnp
from jax.experimental import pallas as pl
from jax.experimental.pallas import tpu as pltpu


def _make_kernel(B, T, D, block_b):
    needs_row_mask = (B % block_b) != 0

    def kernel(pred_ref, targ_ref, mask_ref, w_ref, out_ref):
        # Upcast BEFORE subtracting (avoids cancellation if inputs are bf16).
        pf = pred_ref[...].astype(jnp.float32)               # (TB, T, D)
        tf = targ_ref[...].astype(jnp.float32)
        diff = pf - tf
        sq = diff * diff                                     # L2 _loss
        m = mask_ref[...].astype(jnp.float32)[:, :, None]    # (TB, T, 1) bcast
        w = w_ref[...][None, :, :]                           # (1, T, D), resident
        weighted = sq * m * w                                # pure VPU

        if needs_row_mask:
            # Zero padded rows of the (partial) last batch block; use where so
            # any garbage (even NaN) in the padded region cannot leak through.
            rows = (pl.program_id(0) * block_b
                    + jax.lax.broadcasted_iota(jnp.int32, (block_b, T, D), 0))
            weighted = jnp.where(rows < B, weighted, jnp.float32(0.0))

        # Per-block partial sum: batch-axis sum is plain VPU slab adds, then a
        # single cross-lane reduce of one (T, D) slab (hidden under the DMA of
        # the next multi-MiB tile).  Each block writes its own SMEM slot.
        out_ref[0, 0] = jnp.sum(jnp.sum(weighted, axis=0))

    return kernel


def weighted_state_loss(pred, targ, masks, weights, *, block_b=None):
    """Pallas implementation of WeightedStateLoss.forward (L2 _loss)."""
    B, T, D = pred.shape
    total = B * T * D  # denominator of .mean()

    # Glue: bool masks -> f32 (tiny, B*T); None masks -> all-ones (matches the
    # PyTorch `if masks is not None` branch being skipped).
    if masks is None:
        masks = jnp.ones((B, T), dtype=jnp.float32)
    elif masks.dtype == jnp.bool_:
        masks = masks.astype(jnp.float32)

    # Batch tile: target ~2 MiB per input tile (measured sweet spot for
    # mem-bound elementwise kernels); multiple of 8 when it doesn't cover B so
    # the (TB, T) mask block satisfies the sublane constraint.
    if block_b is None:
        bytes_per_row = T * D * 4
        target = max(1, (2 << 20) // bytes_per_row)
        if target >= B:
            block_b = B
        else:
            block_b = min(B, max(8, (target // 8) * 8))
    grid_b = pl.cdiv(B, block_b)

    kernel = _make_kernel(B, T, D, block_b)

    bytes_accessed = (pred.size * pred.dtype.itemsize
                      + targ.size * targ.dtype.itemsize
                      + masks.size * masks.dtype.itemsize
                      + weights.size * weights.dtype.itemsize
                      + grid_b * 4)

    partials = pl.pallas_call(
        kernel,
        out_shape=jax.ShapeDtypeStruct((grid_b, 1), jnp.float32),
        grid_spec=pltpu.PrefetchScalarGridSpec(
            num_scalar_prefetch=0,
            grid=(grid_b,),
            in_specs=[
                pl.BlockSpec((block_b, T, D), lambda i: (i, 0, 0)),  # pred
                pl.BlockSpec((block_b, T, D), lambda i: (i, 0, 0)),  # targ
                pl.BlockSpec((block_b, T), lambda i: (i, 0)),        # masks (2-D)
                pl.BlockSpec((T, D), lambda i: (0, 0)),              # weights (resident)
            ],
            out_specs=pl.BlockSpec((1, 1), lambda i: (i, 0),
                                   memory_space=pltpu.MemorySpace.SMEM),
        ),
        compiler_params=pltpu.CompilerParams(
            # Per-block partials are independent -> parallel (megacore on v7x).
            dimension_semantics=("parallel",),
            # Safe on all generations (v5e default is only 16 MiB; v7x has
            # 64 MiB physical, so 32 MiB keeps double-buffering intact).
            vmem_limit_bytes=32 * 1024 * 1024,
        ),
        cost_estimate=pl.CostEstimate(
            flops=5 * B * T * D,
            transcendentals=0,
            bytes_accessed=bytes_accessed),
    )(pred, targ, masks, weights)

    # Tiny final reduce over grid_b scalars + mean normalization in XLA.
    weighted_loss = jnp.sum(partials) / jnp.float32(total)
    return weighted_loss, {"a0_loss": weighted_loss}


def _reference(pred, targ, masks, weights):
    loss = (pred - targ) ** 2
    loss = loss * masks[:, :, None].astype(jnp.float32)
    return jnp.mean(loss * weights)


if __name__ == "__main__":
    key = jax.random.PRNGKey(0)

    # --- primary case: matches module's intended small shapes -------------
    B, T, D = 2, 8, 32  # batch, horizon, transition_dim
    k_pred, k_targ, k_mask = jax.random.split(key, 3)

    pred = jax.random.normal(k_pred, (B, T, D), dtype=jnp.float32)
    targ = jax.random.normal(k_targ, (B, T, D), dtype=jnp.float32)
    masks = (jax.random.uniform(k_mask, (B, T)) > 0.3).astype(jnp.float32)

    # deterministic weights buffer (diffuser-style per-timestep discount)
    discounts = 0.99 ** jnp.arange(T, dtype=jnp.float32)
    weights = jnp.broadcast_to(discounts[:, None], (T, D)).astype(jnp.float32)

    weighted_loss, info = weighted_state_loss(pred, targ, masks, weights)
    jax.block_until_ready(weighted_loss)

    ref = _reference(pred, targ, masks, weights)
    assert jnp.allclose(weighted_loss, ref, rtol=1e-5, atol=1e-6), (weighted_loss, ref)
    assert jnp.allclose(info["a0_loss"], weighted_loss)

    # --- secondary case: exercise multi-block grid + partial last block ----
    B2 = 20
    k2p, k2t, k2m = jax.random.split(jax.random.PRNGKey(1), 3)
    pred2 = jax.random.normal(k2p, (B2, T, D), dtype=jnp.float32)
    targ2 = jax.random.normal(k2t, (B2, T, D), dtype=jnp.float32)
    masks2 = (jax.random.uniform(k2m, (B2, T)) > 0.3).astype(jnp.float32)

    loss2, _ = weighted_state_loss(pred2, targ2, masks2, weights, block_b=8)
    jax.block_until_ready(loss2)
    ref2 = _reference(pred2, targ2, masks2, weights)
    assert jnp.allclose(loss2, ref2, rtol=1e-5, atol=1e-6), (loss2, ref2)

    print("KERNEL_OK")
</pallas_src>

<mosaic_0001>
module attributes {stable_mosaic.version = 11 : i64} {
  func.func @kernel(%arg0: i32, %arg1: memref<2x8x32xf32, #tpu.memory_space<vmem>>, %arg2: memref<2x8x32xf32, #tpu.memory_space<vmem>>, %arg3: memref<2x8xf32, #tpu.memory_space<vmem>>, %arg4: memref<8x32xf32, #tpu.memory_space<vmem>>, %arg5: memref<1x1xf32, #tpu.memory_space<smem>>) attributes {dimension_semantics = [#tpu.dimension_semantics<parallel>], iteration_bounds = array<i64: 1>, scalar_prefetch = 0 : i64, scratch_operands = 0 : i64, tpu.core_type = #tpu.core_type<tc>, window_params = [{transform_indices = @transform_0, window_bounds = array<i64: 2, 8, 32>}, {transform_indices = @transform_1, window_bounds = array<i64: 2, 8, 32>}, {transform_indices = @transform_2, window_bounds = array<i64: 2, 8>}, {pipeline_mode = #tpu.pipeline_mode<synchronous>, transform_indices = @transform_3, window_bounds = array<i64: 8, 32>}, {transform_indices = @transform_4, window_bounds = array<i64: 1, 1>}]} {
    %c0 = arith.constant 0 : index
    %c0_0 = arith.constant 0 : index
    %c0_1 = arith.constant 0 : index
    %0 = vector.load %arg1[%c0, %c0_0, %c0_1] : memref<2x8x32xf32, #tpu.memory_space<vmem>>, vector<2x8x32xf32>
    %c0_2 = arith.constant 0 : index
    %c0_3 = arith.constant 0 : index
    %c0_4 = arith.constant 0 : index
    %1 = vector.load %arg2[%c0_2, %c0_3, %c0_4] : memref<2x8x32xf32, #tpu.memory_space<vmem>>, vector<2x8x32xf32>
    %2 = arith.subf %0, %1 : vector<2x8x32xf32>
    %3 = arith.mulf %2, %2 : vector<2x8x32xf32>
    %c0_5 = arith.constant 0 : index
    %c0_6 = arith.constant 0 : index
    %4 = vector.load %arg3[%c0_5, %c0_6] : memref<2x8xf32, #tpu.memory_space<vmem>>, vector<2x8xf32>
    %5 = vector.shape_cast %4 : vector<2x8xf32> to vector<2x8x1xf32>
    %c0_7 = arith.constant 0 : index
    %c0_8 = arith.constant 0 : index
    %6 = vector.load %arg4[%c0_7, %c0_8] : memref<8x32xf32, #tpu.memory_space<vmem>>, vector<8x32xf32>
    %7 = vector.shape_cast %6 : vector<8x32xf32> to vector<1x8x32xf32>
    %8 = vector.broadcast %5 : vector<2x8x1xf32> to vector<2x8x32xf32>
    %9 = arith.mulf %3, %8 : vector<2x8x32xf32>
    %10 = vector.broadcast %7 : vector<1x8x32xf32> to vector<2x8x32xf32>
    %11 = arith.mulf %9, %10 : vector<2x8x32xf32>
    %cst = arith.constant dense<0.000000e+00> : vector<8x32xf32>
    %12 = vector.multi_reduction <add>, %11, %cst [0] : vector<2x8x32xf32> to vector<8x32xf32>
    %13 = vector.shape_cast %12 : vector<8x32xf32> to vector<1x8x32xf32>
    %cst_9 = arith.constant dense<0.000000e+00> : vector<1xf32>
    %14 = vector.multi_reduction <add>, %13, %cst_9 [1, 2] : vector<1x8x32xf32> to vector<1xf32>
    %15 = vector.shape_cast %14 : vector<1xf32> to vector<1x1x1xf32>
    %16 = vector.extract %15[0, 0, 0] : f32 from vector<1x1x1xf32>
    %c0_10 = arith.constant 0 : index
    %c0_11 = arith.constant 0 : index
    %17 = memref.load %arg5[%c0_10, %c0_11] : memref<1x1xf32, #tpu.memory_space<smem>>
    memref.store %16, %arg5[%c0_10, %c0_11] : memref<1x1xf32, #tpu.memory_space<smem>>
    return
  }
  func.func @transform_0(%arg0: i32) -> (i32, i32, i32) {
    %c0_i32 = arith.constant 0 : i32
    %c0_i32_0 = arith.constant 0 : i32
    %c0_i32_1 = arith.constant 0 : i32
    return %arg0, %c0_i32, %c0_i32_0 : i32, i32, i32
  }
  func.func @transform_1(%arg0: i32) -> (i32, i32, i32) {
    %c0_i32 = arith.constant 0 : i32
    %c0_i32_0 = arith.constant 0 : i32
    %c0_i32_1 = arith.constant 0 : i32
    return %arg0, %c0_i32, %c0_i32_0 : i32, i32, i32
  }
  func.func @transform_2(%arg0: i32) -> (i32, i32) {
    %c0_i32 = arith.constant 0 : i32
    %c0_i32_0 = arith.constant 0 : i32
    return %arg0, %c0_i32 : i32, i32
  }
  func.func @transform_3(%arg0: i32) -> (i32, i32) {
    %c0_i32 = arith.constant 0 : i32
    %c0_i32_0 = arith.constant 0 : i32
    %c0_i32_1 = arith.constant 0 : i32
    return %c0_i32, %c0_i32_0 : i32, i32
  }
  func.func @transform_4(%arg0: i32) -> (i32, i32) {
    %c0_i32 = arith.constant 0 : i32
    %c0_i32_0 = arith.constant 0 : i32
    return %arg0, %c0_i32 : i32, i32
  }
}

</mosaic_0001>

<llo_original>
// kernel: tpu_custom_call.1
$region0: #{tpu_custom_call.1}
  #allocation0 [shape = 'u32[]', space=smem, size = 0x4, offset = 0x4, fixed_abs, tag = 'smem constant byte address 0x4 - core index']
  #allocation1 [shape = 'u32[72,128]{1,0:T(1,128)}', space=vmem, size = 0x9000, scoped, tag = 'internal scratch']
  %s0 = inlined_call_operand.hbm [shape: f32[2,8,32], index: 0, kind: input, shape index: {}]
  %s1 = inlined_call_operand.hbm [shape: f32[2,8,32], index: 1, kind: input, shape index: {}]
  %s2 = inlined_call_operand.hbm [shape: f32[2,8], index: 2, kind: input, shape index: {}]
  %s3 = inlined_call_operand.hbm [shape: f32[8,32], index: 3, kind: input, shape index: {}]
  %s4 = inlined_call_operand.hbm [shape: f32[1,1], index: 4, kind: output, shape index: {}]
  %s5 = sld [smem:[#allocation0]]
  $region42: #{tpu_custom_call.1} parent=0
    _
  %s7 = ssub.s32 1, %s5
  %s8 = scalar_select 0, %s7, %s5
  $region1: #{tpu_custom_call.1} parent=0
    #allocation2 [shape = 'u8[8192]{0}', space=vmem, size = 0x2000, scoped, tag = 'input window, operand 0, single buffered']
    #allocation3 [shape = 's32[1]{0}', space=sflag, size = 0x4, scoped, tag = 'scoped memory for tpu_custom_call.1']
    #allocation4 [shape = 's32[1]{0}', space=sflag, size = 0x4, scoped, tag = 'scoped memory for tpu_custom_call.1']
    #allocation5 [shape = 'u8[8192]{0}', space=vmem, size = 0x2000, scoped, tag = 'input window, operand 1, single buffered']
    #allocation6 [shape = 's32[1]{0}', space=sflag, size = 0x4, scoped, tag = 'scoped memory for tpu_custom_call.1']
    #allocation7 [shape = 'u8[1024]{0}', space=vmem, size = 0x400, scoped, tag = 'input window, operand 2, single buffered']
    #allocation8 [shape = 'u8[4096]{0}', space=vmem, size = 0x1000, scoped, tag = 'input window, operand 3, single buffered']
    #allocation9 [shape = 's32[1]{0}', space=sflag, size = 0x4, scoped, tag = 'scoped memory for tpu_custom_call.1']
    #allocation10 [shape = 'u8[512]{0}', space=smem, size = 0x200, scoped, tag = 'output window, operand 0, single buffered']
    %9 = vsyncpa [#allocation3], 0
    %10 = vsyncpa [#allocation6], 0
    %11 = vsyncpa [#allocation9], 0
    %12 = vsyncpa [#allocation4], 0
    // Predicated region
    $region2: #{tpu_custom_call.1} parent=1 // pred_check
      _
    $region3: #{tpu_custom_call.1} parent=1 // pred_check_branch
      %14 = sbr.rel (0) target = $region5
    $region4: #{tpu_custom_call.1} parent=1 // pred_region
      %16 = vsyncadd [#allocation3], 0
      %s17 = sshll.u32 %s0, 4
      %s18 = int_to_ptr.hbm [resolvable:$true] %s17
      %s19 = sshll.u32 [#allocation2], 4
      %s20 = int_to_ptr.vmem [resolvable:$true] %s19
      %25 = dma.hbm_to_vmem [thread:$0]  %s18, 256, %s20, [#allocation3], 128, 128, 8
    $region5: #{tpu_custom_call.1} parent=1 // pred_fallthru
      _
    // Predicated region
    $region6: #{tpu_custom_call.1} parent=1 // pred_check
      _
    $region7: #{tpu_custom_call.1} parent=1 // pred_check_branch
      %27 = sbr.rel (0) target = $region9
    $region8: #{tpu_custom_call.1} parent=1 // pred_region
      %29 = vsyncadd [#allocation6], 0
      %s30 = sshll.u32 %s1, 4
      %s31 = int_to_ptr.hbm [resolvable:$true] %s30
      %s32 = sshll.u32 [#allocation5], 4
      %s33 = int_to_ptr.vmem [resolvable:$true] %s32
      %38 = dma.hbm_to_vmem [thread:$0]  %s31, 256, %s33, [#allocation6], 128, 128, 8
    $region9: #{tpu_custom_call.1} parent=1 // pred_fallthru
      _
    // Predicated region
    $region10: #{tpu_custom_call.1} parent=1 // pred_check
      _
    $region11: #{tpu_custom_call.1} parent=1 // pred_check_branch
      %40 = sbr.rel (0) target = $region13
    $region12: #{tpu_custom_call.1} parent=1 // pred_region
      %42 = vsyncadd [#allocation6], 0
      %s44 = sshll.u32 %s2, 4
      %s45 = int_to_ptr.hbm [resolvable:$true] %s44
      %s46 = sshll.u32 [#allocation7], 4
      %s47 = int_to_ptr.vmem [resolvable:$true] %s46
      %49 = dma.hbm_to_vmem [thread:$0]  %s45, 32, %s47, [#allocation6]
    $region13: #{tpu_custom_call.1} parent=1 // pred_fallthru
      _
    // Predicated region
    $region14: #{tpu_custom_call.1} parent=1 // pred_check
      _
    $region15: #{tpu_custom_call.1} parent=1 // pred_check_branch
      %51 = sbr.rel (0) target = $region17
    $region16: #{tpu_custom_call.1} parent=1 // pred_region
      %53 = vsyncadd [#allocation9], 0
      %s55 = sshll.u32 %s3, 4
      %s56 = int_to_ptr.hbm [resolvable:$true] %s55
      %s57 = sshll.u32 [#allocation8], 4
      %s58 = int_to_ptr.vmem [resolvable:$true] %s57
      %60 = dma.hbm_to_vmem [thread:$0]  %s56, 128, %s58, [#allocation9]
    $region17: #{tpu_custom_call.1} parent=1 // pred_fallthru
      _
    // Predicated region
    $region18: #{tpu_custom_call.1} parent=1 // pred_check
      _
    $region19: #{tpu_custom_call.1} parent=1 // pred_check_branch
      %62 = sbr.rel (0) target = $region21
    $region20: #{tpu_custom_call.1} parent=1 // pred_region
      %64 = dma.done [#allocation3], 256
    $region21: #{tpu_custom_call.1} parent=1 // pred_fallthru
      _
    // Predicated region
    $region22: #{tpu_custom_call.1} parent=1 // pred_check
      _
    $region23: #{tpu_custom_call.1} parent=1 // pred_check_branch
      %66 = sbr.rel (0) target = $region25
    $region24: #{tpu_custom_call.1} parent=1 // pred_region
      %68 = dma.done [#allocation6], 256
    $region25: #{tpu_custom_call.1} parent=1 // pred_fallthru
      _
    // Predicated region
    $region26: #{tpu_custom_call.1} parent=1 // pred_check
      _
    $region27: #{tpu_custom_call.1} parent=1 // pred_check_branch
      %70 = sbr.rel (0) target = $region29
    $region28: #{tpu_custom_call.1} parent=1 // pred_region
      %72 = dma.done [#allocation6], 32
    $region29: #{tpu_custom_call.1} parent=1 // pred_fallthru
      _
    // Predicated region
    $region30: #{tpu_custom_call.1} parent=1 // pred_check
      _
    $region31: #{tpu_custom_call.1} parent=1 // pred_check_branch
      %74 = sbr.rel (0) target = $region33
    $region32: #{tpu_custom_call.1} parent=1 // pred_region
      %76 = dma.done [#allocation9], 128
    $region33: #{tpu_custom_call.1} parent=1 // pred_fallthru
      _
    %v77 = vld [vmem:[#allocation2] sm:$0xff]
    %v78 = vld [vmem:[#allocation2 + $0x8] sm:$0xff]
    %v79 = vld [vmem:[#allocation5] sm:$0xff]
    %v80 = vld [vmem:[#allocation5 + $0x8] sm:$0xff]
    %v81 = vsub.f32 %v77, %v79
    %v82 = vsub.f32 %v78, %v80
    %v83 = vmul.f32 %v81, %v81
    %v84 = vmul.f32 %v82, %v82
    %v85 = vld [vmem:[#allocation7] sm:$0x3]
    %v86 = vperm.slane %v85, 0
    %v87 = vlaneseq
    %v88 = vshrl.u32 %v87, 7
    %90 = vset.pattern.permute.xlu0 %v88
    %91 = vperm.xlu0 %90, %v86
    %v92 = vpop.permute.xlu0 %91
    %v93 = vperm.slane %v85, 1
    %v94 = vlaneseq
    %v95 = vshrl.u32 %v94, 7
    %97 = vset.pattern.permute.xlu0 %v95
    %98 = vperm.xlu0 %97, %v93
    %v99 = vpop.permute.xlu0 %98
    %v100 = vld [vmem:[#allocation8] sm:$0xff]
    %v101 = vmul.f32 %v83, %v92
    %v102 = vmul.f32 %v84, %v99
    %v103 = vmul.f32 %v101, %v100
    %v104 = vmul.f32 %v102, %v100
    %vm105 = vcmask 261120
    %v106 = vsel %vm105, %v103, 0.0
    %v107 = vsel %vm105, %v104, 0.0
    %v108 = vadd.f32 %v106, %v107
    %v109 = vsel %vm105, %v108, 0.0
    %110 = vadd.xlane.f32.xlu0 %v109
    %v111 = vpop.xlane.xlu0 %110
    %v112 = vrot.slane %v111, 4
    %v113 = vadd.f32 %v111, %v112
    %v114 = vrot.slane %v113, 2
    %v115 = vadd.f32 %v113, %v114
    %v116 = vrot.slane %v115, 1
    %v117 = vadd.f32 %v115, %v116
    %s118 = vtos %v117
    %s119 = scalar_lea.smem [#allocation10], 0
    %120 = sst [smem:[%s119]] %s118
    // Predicated region
    $region34: #{tpu_custom_call.1} parent=1 // pred_check
      _
    $region35: #{tpu_custom_call.1} parent=1 // pred_check_branch
      %122 = sbr.rel (0) target = $region37
    $region36: #{tpu_custom_call.1} parent=1 // pred_region
      %124 = vsyncadd [#allocation4], 0
      %s126 = sshll.u32 %s4, 4
      %s127 = int_to_ptr.hbm [resolvable:$true] %s126
      %129 = dma.smem_to_hbm [#allocation10], 16, %s127, [#allocation4]
    $region37: #{tpu_custom_call.1} parent=1 // pred_fallthru
      _
    // Predicated region
    $region38: #{tpu_custom_call.1} parent=1 // pred_check
      _
    $region39: #{tpu_custom_call.1} parent=1 // pred_check_branch
      %131 = sbr.rel (0) target = $region41
    $region40: #{tpu_custom_call.1} parent=1 // pred_region
      %133 = dma.done [#allocation4], 16
    $region41: #{tpu_custom_call.1} parent=1 // pred_fallthru
      _
    %134 = sfence
    %135 = vsyncpa [#allocation3], 1
    %136 = vsyncpa [#allocation6], 1
    %137 = vsyncpa [#allocation9], 1
    %138 = vsyncpa [#allocation4], 1

</llo_original>
